<compile_context>
chip_gen: v5e
topology: v5e:2x2
jax: 0.10.0
libtpu: 0.0.40
codegen_flags: <defaults>
</compile_context>

<pallas_src>
import jax
import jax.numpy as jnp
from jax.experimental import pallas as pl
from jax.experimental.pallas import tpu as pltpu


def _l2proj_kernel(eps_ref, x_ref, o_ref):
    # eps_ref: (TB, 1) f32 in VMEM; x_ref/o_ref: (TB, D) tile in VMEM.
    x = x_ref[...].astype(jnp.float32)                               # (TB, D)
    eps = eps_ref[...].astype(jnp.float32)                           # (TB, 1)
    norm = jnp.sqrt(jnp.sum(x * x, axis=1, keepdims=True))           # (TB, 1)
    # eps / max(norm, eps), reciprocal on the EUP slot (approx).
    scale = eps * pl.reciprocal(jnp.maximum(norm, eps), approx=True) # (TB, 1)
    o_ref[...] = (x * scale).astype(o_ref.dtype)


def l2proj(x, stdn, alpha, *, target_tile_bytes=2 << 20):
    """x: (N, C, H, W) float32, stdn: (N,) float32, alpha: scalar float32."""
    N, C, H, W = x.shape
    D = C * H * W
    # TODO(synk): for D not a multiple of 128 (or D too large for one VMEM
    # block), pad the lane dim / add a trailing "arbitrary" grid axis over
    # D-chunks with a norm accumulator; here D = 1024 fits in one block.
    assert D % 128 == 0, "C*H*W must be a multiple of 128 for this tiling"

    # Tiny per-sample scalar prep stays in plain JAX (glue).
    numX = jnp.sqrt(jnp.asarray(D - 1, dtype=jnp.float32))
    eps = (jnp.exp(alpha) * stdn.astype(jnp.float32) * numX).astype(jnp.float32)  # (N,)

    # Samples per grid step: multiple of 8 (sublane), aim for ~target_tile_bytes
    # of x per block.  ~2 MiB x tile => double-buffered in+out ~8 MiB, which is
    # safe on v5e's 16 MiB default scoped VMEM and on v6e/v7x.  (On v6e you can
    # raise target_tile_bytes + vmem_limit_bytes for slightly better DMA eff.)
    tb_cap = max(8, (target_tile_bytes // (D * 4)) // 8 * 8)
    TB = int(min(tb_cap, ((N + 7) // 8) * 8))
    Npad = pl.cdiv(N, TB) * TB

    x2 = x.reshape(N, D)
    if Npad != N:
        # Zero-pad extra rows; pad eps with 1.0 so padded rows scale by 1*0/1=0.
        x2 = jnp.pad(x2, ((0, Npad - N), (0, 0)))
        eps = jnp.pad(eps, (0, Npad - N), constant_values=1.0)
    eps2 = eps.reshape(Npad, 1)

    out = pl.pallas_call(
        _l2proj_kernel,
        out_shape=jax.ShapeDtypeStruct((Npad, D), x.dtype),
        grid=(Npad // TB,),
        in_specs=[
            pl.BlockSpec((TB, 1), lambda i: (i, 0)),   # eps, per-sample column
            pl.BlockSpec((TB, D), lambda i: (i, 0)),   # TB samples of x, lane-dense
        ],
        out_specs=pl.BlockSpec((TB, D), lambda i: (i, 0)),
        compiler_params=pltpu.CompilerParams(
            dimension_semantics=("parallel",)),
    )(eps2, x2)

    return out[:N].reshape(N, C, H, W)


def _reference(x, stdn, alpha):
    N, C, H, W = x.shape
    D = C * H * W
    numX = jnp.sqrt(jnp.asarray(D - 1, dtype=jnp.float32))
    eps = (jnp.exp(alpha) * stdn * numX)[:, None, None, None]
    x_norm = jnp.linalg.norm(x.reshape(N, -1), axis=1).reshape(N, 1, 1, 1)
    max_norm = jnp.maximum(x_norm, eps)
    return x * (eps / max_norm)


if __name__ == "__main__":
    key = jax.random.PRNGKey(0)
    kx, ks, ka = jax.random.split(key, 3)

    N, C, H, W = 2, 4, 16, 16
    x = jax.random.normal(kx, (N, C, H, W), dtype=jnp.float32)
    stdn = jax.random.uniform(ks, (N,), dtype=jnp.float32, minval=0.01, maxval=0.1)
    alpha = jax.random.normal(ka, (), dtype=jnp.float32)

    out = l2proj(x, stdn, alpha)
    out = jax.block_until_ready(out)

    ref = _reference(x, stdn, alpha)
    assert out.shape == (N, C, H, W)
    # Tolerance relaxed slightly for the EUP approximate reciprocal.
    assert jnp.allclose(out, ref, rtol=1e-3, atol=1e-3), "mismatch vs reference"

    print("KERNEL_OK")
</pallas_src>

<mosaic_0001>
module attributes {stable_mosaic.version = 11 : i64} {
  func.func @_l2proj_kernel(%arg0: i32, %arg1: memref<8x1xf32, #tpu.memory_space<vmem>>, %arg2: memref<8x1024xf32, #tpu.memory_space<vmem>>, %arg3: memref<8x1024xf32, #tpu.memory_space<vmem>>) attributes {dimension_semantics = [#tpu.dimension_semantics<parallel>], iteration_bounds = array<i64: 1>, scalar_prefetch = 0 : i64, scratch_operands = 0 : i64, tpu.core_type = #tpu.core_type<tc>, window_params = [{transform_indices = @transform_0, window_bounds = array<i64: 8, 1>}, {transform_indices = @transform_1, window_bounds = array<i64: 8, 1024>}, {transform_indices = @transform_2, window_bounds = array<i64: 8, 1024>}]} {
    %c0 = arith.constant 0 : index
    %c0_0 = arith.constant 0 : index
    %0 = vector.load %arg2[%c0, %c0_0] : memref<8x1024xf32, #tpu.memory_space<vmem>>, vector<8x1024xf32>
    %c0_1 = arith.constant 0 : index
    %c0_2 = arith.constant 0 : index
    %1 = vector.load %arg1[%c0_1, %c0_2] : memref<8x1xf32, #tpu.memory_space<vmem>>, vector<8x1xf32>
    %2 = arith.mulf %0, %0 : vector<8x1024xf32>
    %cst = arith.constant dense<0.000000e+00> : vector<8xf32>
    %3 = vector.multi_reduction <add>, %2, %cst [1] : vector<8x1024xf32> to vector<8xf32>
    %4 = vector.shape_cast %3 : vector<8xf32> to vector<8x1xf32>
    %5 = math.sqrt %4 : vector<8x1xf32>
    %6 = arith.maximumf %5, %1 : vector<8x1xf32>
    %7 = tpu.reciprocal %6 {approx = true} : vector<8x1xf32> -> vector<8x1xf32>
    %8 = arith.mulf %1, %7 : vector<8x1xf32>
    %9 = vector.broadcast %8 : vector<8x1xf32> to vector<8x1024xf32>
    %10 = arith.mulf %0, %9 : vector<8x1024xf32>
    %c0_3 = arith.constant 0 : index
    %c0_4 = arith.constant 0 : index
    %11 = vector.load %arg3[%c0_3, %c0_4] : memref<8x1024xf32, #tpu.memory_space<vmem>>, vector<8x1024xf32>
    tpu.vector_store %arg3[%c0_3, %c0_4], %10 {strides = array<i32>} : memref<8x1024xf32, #tpu.memory_space<vmem>>, vector<8x1024xf32>,
    return
  }
  func.func @transform_0(%arg0: i32) -> (i32, i32) {
    %c0_i32 = arith.constant 0 : i32
    %c0_i32_0 = arith.constant 0 : i32
    return %arg0, %c0_i32 : i32, i32
  }
  func.func @transform_1(%arg0: i32) -> (i32, i32) {
    %c0_i32 = arith.constant 0 : i32
    %c0_i32_0 = arith.constant 0 : i32
    return %arg0, %c0_i32 : i32, i32
  }
  func.func @transform_2(%arg0: i32) -> (i32, i32) {
    %c0_i32 = arith.constant 0 : i32
    %c0_i32_0 = arith.constant 0 : i32
    return %arg0, %c0_i32 : i32, i32
  }
}

</mosaic_0001>

<llo_original>
// kernel: tpu_custom_call.1
$region0: #{tpu_custom_call.1}
  #allocation0 [shape = 'u32[]', space=smem, size = 0x4, offset = 0x4, fixed_abs, tag = 'smem constant byte address 0x4 - core index']
  #allocation1 [shape = 'u32[72,128]{1,0:T(1,128)}', space=vmem, size = 0x9000, scoped, tag = 'internal scratch']
  %s0 = inlined_call_operand.vmem [shape: f32[8,1], index: 0, kind: input, shape index: {}]
  %s1 = inlined_call_operand.hbm [shape: f32[8,1024], index: 1, kind: input, shape index: {}]
  %s2 = inlined_call_operand.hbm [shape: f32[8,1024], index: 2, kind: output, shape index: {}]
  %s3 = sld [smem:[#allocation0]]
  $region22: #{tpu_custom_call.1} parent=0
    _
  %s5 = ssub.s32 1, %s3
  %s6 = scalar_select 0, %s5, %s3
  $region1: #{tpu_custom_call.1} parent=0
    #allocation2 [shape = 'u8[32768]{0}', space=vmem, size = 0x8000, scoped, tag = 'input window, operand 1, single buffered']
    #allocation3 [shape = 's32[1]{0}', space=sflag, size = 0x4, scoped, tag = 'scoped memory for tpu_custom_call.1']
    #allocation4 [shape = 's32[1]{0}', space=sflag, size = 0x4, scoped, tag = 'scoped memory for tpu_custom_call.1']
    #allocation5 [shape = 'u8[32768]{0}', space=vmem, size = 0x8000, scoped, tag = 'output window, operand 0, single buffered']
    %7 = vsyncpa [#allocation3], 0
    %8 = vsyncpa [#allocation4], 0
    // Predicated region
    $region2: #{tpu_custom_call.1} parent=1 // pred_check
      _
    $region3: #{tpu_custom_call.1} parent=1 // pred_check_branch
      %10 = sbr.rel (0) target = $region5
    $region4: #{tpu_custom_call.1} parent=1 // pred_region
      _
    $region5: #{tpu_custom_call.1} parent=1 // pred_fallthru
      _
    // Predicated region
    $region6: #{tpu_custom_call.1} parent=1 // pred_check
      _
    $region7: #{tpu_custom_call.1} parent=1 // pred_check_branch
      %12 = sbr.rel (0) target = $region9
    $region8: #{tpu_custom_call.1} parent=1 // pred_region
      %14 = vsyncadd [#allocation3], 0
      %s16 = sshll.u32 %s1, 4
      %s17 = int_to_ptr.hbm [resolvable:$true] %s16
      %s18 = sshll.u32 [#allocation2], 4
      %s19 = int_to_ptr.vmem [resolvable:$true] %s18
      %21 = dma.hbm_to_vmem [thread:$0]  %s17, 1024, %s19, [#allocation3]
    $region9: #{tpu_custom_call.1} parent=1 // pred_fallthru
      _
    // Predicated region
    $region10: #{tpu_custom_call.1} parent=1 // pred_check
      _
    $region11: #{tpu_custom_call.1} parent=1 // pred_check_branch
      %23 = sbr.rel (0) target = $region13
    $region12: #{tpu_custom_call.1} parent=1 // pred_region
      %25 = dma.done [#allocation3], 1024
    $region13: #{tpu_custom_call.1} parent=1 // pred_fallthru
      _
    %v26 = vld [vmem:[#allocation2] sm:$0xff]
    %v27 = vld [vmem:[#allocation2 + $0x8] sm:$0xff]
    %v28 = vld [vmem:[#allocation2 + $0x10] sm:$0xff]
    %v29 = vld [vmem:[#allocation2 + $0x18] sm:$0xff]
    %v30 = vld [vmem:[#allocation2 + $0x20] sm:$0xff]
    %v31 = vld [vmem:[#allocation2 + $0x28] sm:$0xff]
    %v32 = vld [vmem:[#allocation2 + $0x30] sm:$0xff]
    %v33 = vld [vmem:[#allocation2 + $0x38] sm:$0xff]
    %v34 = vld [vmem:[%s0] sm:$0xff]
    %v35 = vmul.f32 %v26, %v26
    %v36 = vmul.f32 %v27, %v27
    %v37 = vmul.f32 %v28, %v28
    %v38 = vmul.f32 %v29, %v29
    %v39 = vmul.f32 %v30, %v30
    %v40 = vmul.f32 %v31, %v31
    %v41 = vmul.f32 %v32, %v32
    %v42 = vmul.f32 %v33, %v33
    %v43 = vadd.f32 %v35, %v36
    %v44 = vadd.f32 %v43, %v37
    %v45 = vadd.f32 %v44, %v38
    %v46 = vadd.f32 %v45, %v39
    %v47 = vadd.f32 %v46, %v40
    %v48 = vadd.f32 %v47, %v41
    %v49 = vadd.f32 %v48, %v42
    %50 = vadd.xlane.f32.xlu0 %v49
    %v51 = vpop.xlane.xlu0 %50
    %v52 = vrsqrt.pop %v51
    %v53 = vmul.f32 %v52, %v51
    %v54 = vmul.f32 %v53, %v52
    %v55 = vmul.f32 0.5, %v54
    %v56 = vsub.f32 1.5, %v55
    %v57 = vmul.f32 %v52, %v56
    %v58 = vmul.f32 %v51, %v57
    %vm59 = vcmp.eq.f32.partialorder %v51, inf
    %v60 = vsel %vm59, %v51, %v58
    %vm61 = vcmp.eq.f32.partialorder %v51, 0.0
    %v62 = vand.u32 %v51, 2147483648
    %v63 = vsel %vm61, %v62, %v60
    %v64 = vmax.f32 %v63, %v34
    %v65 = vrcp.pop %v64
    %v66 = vmul.f32 %v34, %v65
    %68 = vset.pattern.permute.xlu0 0
    %69 = vperm.xlu0 %68, %v66
    %v70 = vpop.permute.xlu0 %69
    %v72 = vmul.f32 %v26, %v70
    %v73 = vmul.f32 %v27, %v70
    %v74 = vmul.f32 %v28, %v70
    %v75 = vmul.f32 %v29, %v70
    %v76 = vmul.f32 %v30, %v70
    %v77 = vmul.f32 %v31, %v70
    %v78 = vmul.f32 %v32, %v70
    %v79 = vmul.f32 %v33, %v70
    %80 = vst [vmem:[#allocation5] sm:$0xff] %v72
    %81 = vst [vmem:[#allocation5 + $0x8] sm:$0xff] %v73
    %82 = vst [vmem:[#allocation5 + $0x10] sm:$0xff] %v74
    %83 = vst [vmem:[#allocation5 + $0x18] sm:$0xff] %v75
    %84 = vst [vmem:[#allocation5 + $0x20] sm:$0xff] %v76
    %85 = vst [vmem:[#allocation5 + $0x28] sm:$0xff] %v77
    %86 = vst [vmem:[#allocation5 + $0x30] sm:$0xff] %v78
    %87 = vst [vmem:[#allocation5 + $0x38] sm:$0xff] %v79
    // Predicated region
    $region14: #{tpu_custom_call.1} parent=1 // pred_check
      _
    $region15: #{tpu_custom_call.1} parent=1 // pred_check_branch
      %89 = sbr.rel (0) target = $region17
    $region16: #{tpu_custom_call.1} parent=1 // pred_region
      %91 = vsyncadd [#allocation4], 0
      %s93 = sshll.u32 [#allocation5], 4
      %s94 = int_to_ptr.vmem [resolvable:$true] %s93
      %s95 = sshll.u32 %s2, 4
      %s96 = int_to_ptr.hbm [resolvable:$true] %s95
      %98 = dma.vmem_to_hbm [thread:$0]  %s94, 1024, %s96, [#allocation4]
    $region17: #{tpu_custom_call.1} parent=1 // pred_fallthru
      _
    // Predicated region
    $region18: #{tpu_custom_call.1} parent=1 // pred_check
      _
    $region19: #{tpu_custom_call.1} parent=1 // pred_check_branch
      %100 = sbr.rel (0) target = $region21
    $region20: #{tpu_custom_call.1} parent=1 // pred_region
      %102 = dma.done [#allocation4], 1024
    $region21: #{tpu_custom_call.1} parent=1 // pred_fallthru
      _
    %103 = vsyncpa [#allocation3], 1
    %104 = vsyncpa [#allocation4], 1

</llo_original>
